<compile_context>
chip_gen: v7x
topology: tpu7x:2x2x1
jax: 0.10.0
libtpu: 0.0.40
codegen_flags: <defaults>
</compile_context>

<pallas_src>
import jax
import jax.numpy as jnp
from jax.experimental import pallas as pl
from jax.experimental.pallas import tpu as pltpu


def _round_up(n, m):
    return ((n + m - 1) // m) * m


def _mlp_coxtime_kernel(x_ref, t_ref,
                        w1x_ref, w1t_ref, b1_ref,
                        w2_ref, b2_ref,
                        w3_ref, bout_ref,
                        o_ref):
    # Layer 1: Linear (concat fused: x@W1_x + time*w1_t) -> ReLU.  f32 accumulation.
    h = jnp.dot(x_ref[...], w1x_ref[...], preferred_element_type=jnp.float32)
    h = h + t_ref[...] * w1t_ref[...] + b1_ref[...]
    h = jnp.maximum(h, 0.0)

    # Layer 2: Linear (BN1 already folded into w2/b2) -> ReLU.
    h = jnp.dot(h.astype(jnp.bfloat16), w2_ref[...],
                preferred_element_type=jnp.float32)
    h = jnp.maximum(h + b2_ref[...], 0.0)

    # Output layer: N=1 matmul replaced by VPU mul + lane reduce (BN2 folded into w3/bout).
    o_ref[...] = jnp.sum(h * w3_ref[...], axis=-1, keepdims=True) + bout_ref[...]


def mlp_vanilla_coxtime_forward(x, time, kernel_params, tile_b=512):
    """x: (B, F) float, time: (B, 1) float. Returns (B, 1) float32."""
    (w1x, w1t, b1, w2, b2, w3_row, b_out) = kernel_params
    B, F = x.shape
    H1 = w1x.shape[1]
    H2 = w2.shape[1]

    # Tile the batch: multiple of 8 sublanes, capped at tile_b; pad B to a multiple of it.
    tb = min(tile_b, _round_up(B, 8))
    B_pad = _round_up(B, tb)

    x_bf = x.astype(jnp.bfloat16)          # big activation input -> bf16 halves HBM traffic
    t_f = time.astype(jnp.float32)         # tiny; keep f32 for exact affine math
    if B_pad != B:
        pad = B_pad - B
        x_bf = jnp.pad(x_bf, ((0, pad), (0, 0)))
        t_f = jnp.pad(t_f, ((0, pad), (0, 0)))

    grid = (pl.cdiv(B_pad, tb),)

    out = pl.pallas_call(
        _mlp_coxtime_kernel,
        out_shape=jax.ShapeDtypeStruct((B_pad, 1), jnp.float32),
        grid=grid,
        in_specs=[
            pl.BlockSpec((tb, F), lambda i: (i, 0)),      # x tile
            pl.BlockSpec((tb, 1), lambda i: (i, 0)),      # time tile
            pl.BlockSpec((F, H1), lambda i: (0, 0)),      # W1_x   (VMEM-resident)
            pl.BlockSpec((1, H1), lambda i: (0, 0)),      # w1_t
            pl.BlockSpec((1, H1), lambda i: (0, 0)),      # b1
            pl.BlockSpec((H1, H2), lambda i: (0, 0)),     # W2 (BN1 folded)
            pl.BlockSpec((1, H2), lambda i: (0, 0)),      # b2 (BN1 folded)
            pl.BlockSpec((1, H2), lambda i: (0, 0)),      # w3 row (BN2 folded)
            pl.BlockSpec((1, 1), lambda i: (0, 0)),       # output bias (BN2 shift fold)
        ],
        out_specs=pl.BlockSpec((tb, 1), lambda i: (i, 0)),
        compiler_params=pltpu.CompilerParams(
            dimension_semantics=("parallel",)),
    )(x_bf, t_f, w1x, w1t, b1, w2, b2, w3_row, b_out)

    return out[:B]


def init_params(key, in_features, num_nodes):
    """Synthetic init matching the PyTorch module's parameter shapes.

    Linear weights: kaiming_normal_(nonlinearity='relu') -> std = sqrt(2 / fan_in)
    Linear biases:  U(-1/sqrt(fan_in), 1/sqrt(fan_in))  (PyTorch default)
    BatchNorm1d:    gamma=1, beta=0, running_mean=0, running_var=1, eps=1e-5 (eval mode,
                    represented as folded per-feature scale/shift)
    Output Linear:  (num_nodes[-1] -> 1), no bias.
    Weights are stored transposed vs PyTorch: (in_features, out_features).
    """
    eps = 1e-5
    dims = [in_features + 1] + list(num_nodes)  # +1 for the time feature
    params = []
    for i in range(len(num_nodes)):
        fan_in, fan_out = dims[i], dims[i + 1]
        key, kw, kb = jax.random.split(key, 3)
        std = (2.0 / fan_in) ** 0.5
        w = std * jax.random.normal(kw, (fan_in, fan_out), dtype=jnp.float32)
        bound = 1.0 / (fan_in ** 0.5)
        b = jax.random.uniform(kb, (1, fan_out), minval=-bound, maxval=bound,
                               dtype=jnp.float32)
        # eval-mode BN fold: scale = gamma / sqrt(var + eps), shift = beta - mean * scale
        scale = jnp.full((1, fan_out), 1.0 / (1.0 + eps) ** 0.5, dtype=jnp.float32)
        shift = jnp.zeros((1, fan_out), dtype=jnp.float32)
        params.extend([w, b, scale, shift])
    fan_in = dims[-1]
    key, kw = jax.random.split(key)
    std = (2.0 / fan_in) ** 0.5
    w_out = std * jax.random.normal(kw, (fan_in, 1), dtype=jnp.float32)
    params.append(w_out)
    return tuple(params)


def prepare_kernel_params(raw_params):
    """Fold BN affines into downstream weights, split W1, and cast for the kernel."""
    (w1, b1, s1, t1, w2, b2, s2, t2, w3) = raw_params
    # Split W1: the time feature is the LAST column of concat([input, time], dim=1).
    w1x = w1[:-1, :]                      # (F, H1)
    w1t = w1[-1:, :]                      # (1, H1)
    # Fold BN1 into layer 2:  (relu(h)*s1 + t1) @ W2 == relu(h) @ (diag(s1) W2) + t1 @ W2
    w2f = s1.reshape(-1, 1) * w2          # (H1, H2)
    b2f = b2 + t1 @ w2                    # (1, H2)
    # Fold BN2 into the output layer (produces a scalar output bias).
    w3f = s2.reshape(-1, 1) * w3          # (H2, 1)
    b_out = t2 @ w3                       # (1, 1)
    w3_row = w3f.reshape(1, -1)           # (1, H2)
    return (w1x.astype(jnp.bfloat16),
            w1t.astype(jnp.float32),
            b1.astype(jnp.float32),
            w2f.astype(jnp.bfloat16),
            b2f.astype(jnp.float32),
            w3_row.astype(jnp.float32),
            b_out.astype(jnp.float32))


def _ref_forward_f32(x, time, raw_params):
    """Original (unfolded) semantics in pure f32 JAX."""
    (w1, b1, s1, t1, w2, b2, s2, t2, w3) = raw_params
    h = jnp.concatenate([x, time], axis=1)
    h = jnp.maximum(h @ w1 + b1, 0.0) * s1 + t1
    h = jnp.maximum(h @ w2 + b2, 0.0) * s2 + t2
    return h @ w3


def _ref_forward_emulated(x, time, kernel_params):
    """Pure-JAX replica of the kernel's exact math (same folds / casts)."""
    (w1x, w1t, b1, w2, b2, w3_row, b_out) = kernel_params
    h = jnp.dot(x.astype(jnp.bfloat16), w1x, preferred_element_type=jnp.float32)
    h = jnp.maximum(h + time.astype(jnp.float32) * w1t + b1, 0.0)
    h = jnp.dot(h.astype(jnp.bfloat16), w2, preferred_element_type=jnp.float32)
    h = jnp.maximum(h + b2, 0.0)
    return jnp.sum(h * w3_row, axis=-1, keepdims=True) + b_out


if __name__ == "__main__":
    in_features = 4
    num_nodes = [32, 32]

    key = jax.random.PRNGKey(0)
    key, kx, kt, kp = jax.random.split(key, 4)
    raw_params = init_params(kp, in_features, num_nodes)
    kernel_params = prepare_kernel_params(raw_params)

    # Small shape (single tile).
    batch = 8
    x = jax.random.normal(kx, (batch, in_features), dtype=jnp.float32)
    time = jax.random.normal(kt, (batch, 1), dtype=jnp.float32)

    out = mlp_vanilla_coxtime_forward(x, time, kernel_params)
    out = jax.block_until_ready(out)
    assert out.shape == (batch, 1)
    ref_em = _ref_forward_emulated(x, time, kernel_params)
    ref_f32 = _ref_forward_f32(x, time, raw_params)
    assert jnp.allclose(out, ref_em, atol=1e-4, rtol=1e-4)
    assert jnp.allclose(out, ref_f32, atol=5e-2, rtol=5e-2)

    # Larger batch exercising multi-tile grid + tail padding (600 -> padded to 1024, 2 tiles).
    key, kx2, kt2 = jax.random.split(key, 3)
    batch2 = 600
    x2 = jax.random.normal(kx2, (batch2, in_features), dtype=jnp.float32)
    time2 = jax.random.normal(kt2, (batch2, 1), dtype=jnp.float32)
    out2 = jax.block_until_ready(mlp_vanilla_coxtime_forward(x2, time2, kernel_params))
    assert out2.shape == (batch2, 1)
    ref2_em = _ref_forward_emulated(x2, time2, kernel_params)
    ref2_f32 = _ref_forward_f32(x2, time2, raw_params)
    assert jnp.allclose(out2, ref2_em, atol=1e-4, rtol=1e-4)
    assert jnp.allclose(out2, ref2_f32, atol=5e-2, rtol=5e-2)

    print("KERNEL_OK")
</pallas_src>

<mosaic_0001>
module attributes {stable_mosaic.version = 11 : i64} {
  func.func @_mlp_coxtime_kernel(%arg0: i32, %arg1: memref<8x4xbf16, #tpu.memory_space<vmem>>, %arg2: memref<8x1xf32, #tpu.memory_space<vmem>>, %arg3: memref<4x32xbf16, #tpu.memory_space<vmem>>, %arg4: memref<1x32xf32, #tpu.memory_space<vmem>>, %arg5: memref<1x32xf32, #tpu.memory_space<vmem>>, %arg6: memref<32x32xbf16, #tpu.memory_space<vmem>>, %arg7: memref<1x32xf32, #tpu.memory_space<vmem>>, %arg8: memref<1x32xf32, #tpu.memory_space<vmem>>, %arg9: memref<1x1xf32, #tpu.memory_space<vmem>>, %arg10: memref<8x1xf32, #tpu.memory_space<vmem>>) attributes {dimension_semantics = [#tpu.dimension_semantics<parallel>], iteration_bounds = array<i64: 1>, scalar_prefetch = 0 : i64, scratch_operands = 0 : i64, tpu.core_type = #tpu.core_type<tc>, window_params = [{transform_indices = @transform_0, window_bounds = array<i64: 8, 4>}, {transform_indices = @transform_1, window_bounds = array<i64: 8, 1>}, {pipeline_mode = #tpu.pipeline_mode<synchronous>, transform_indices = @transform_2, window_bounds = array<i64: 4, 32>}, {pipeline_mode = #tpu.pipeline_mode<synchronous>, transform_indices = @transform_3, window_bounds = array<i64: 1, 32>}, {pipeline_mode = #tpu.pipeline_mode<synchronous>, transform_indices = @transform_4, window_bounds = array<i64: 1, 32>}, {pipeline_mode = #tpu.pipeline_mode<synchronous>, transform_indices = @transform_5, window_bounds = array<i64: 32, 32>}, {pipeline_mode = #tpu.pipeline_mode<synchronous>, transform_indices = @transform_6, window_bounds = array<i64: 1, 32>}, {pipeline_mode = #tpu.pipeline_mode<synchronous>, transform_indices = @transform_7, window_bounds = array<i64: 1, 32>}, {pipeline_mode = #tpu.pipeline_mode<synchronous>, transform_indices = @transform_8, window_bounds = array<i64: 1, 1>}, {transform_indices = @transform_9, window_bounds = array<i64: 8, 1>}]} {
    %c0 = arith.constant 0 : index
    %c0_0 = arith.constant 0 : index
    %0 = vector.load %arg1[%c0, %c0_0] : memref<8x4xbf16, #tpu.memory_space<vmem>>, vector<8x4xbf16>
    %c0_1 = arith.constant 0 : index
    %c0_2 = arith.constant 0 : index
    %1 = vector.load %arg3[%c0_1, %c0_2] : memref<4x32xbf16, #tpu.memory_space<vmem>>, vector<4x32xbf16>
    %cst = arith.constant dense<0.000000e+00> : vector<8x32xf32>
    %2 = tpu.matmul %0, %1, %cst {dimension_numbers = #tpu.dot_dimension_numbers<[1], [0], [0], [1], [0, 0, 1, 1], [], []>} : vector<8x4xbf16>, vector<4x32xbf16>, vector<8x32xf32> -> vector<8x32xf32>
    %c0_3 = arith.constant 0 : index
    %c0_4 = arith.constant 0 : index
    %3 = vector.load %arg2[%c0_3, %c0_4] : memref<8x1xf32, #tpu.memory_space<vmem>>, vector<8x1xf32>
    %c0_5 = arith.constant 0 : index
    %c0_6 = arith.constant 0 : index
    %4 = vector.load %arg4[%c0_5, %c0_6] : memref<1x32xf32, #tpu.memory_space<vmem>>, vector<1x32xf32>
    %5 = vector.broadcast %3 : vector<8x1xf32> to vector<8x32xf32>
    %6 = vector.broadcast %4 : vector<1x32xf32> to vector<8x32xf32>
    %7 = arith.mulf %5, %6 : vector<8x32xf32>
    %8 = arith.addf %2, %7 : vector<8x32xf32>
    %c0_7 = arith.constant 0 : index
    %c0_8 = arith.constant 0 : index
    %9 = vector.load %arg5[%c0_7, %c0_8] : memref<1x32xf32, #tpu.memory_space<vmem>>, vector<1x32xf32>
    %10 = vector.broadcast %9 : vector<1x32xf32> to vector<8x32xf32>
    %11 = arith.addf %8, %10 : vector<8x32xf32>
    %cst_9 = arith.constant 0.000000e+00 : f32
    %12 = vector.broadcast %cst_9 : f32 to vector<8x32xf32>
    %13 = arith.maximumf %11, %12 : vector<8x32xf32>
    %14 = arith.truncf %13 : vector<8x32xf32> to vector<8x32xbf16>
    %c0_10 = arith.constant 0 : index
    %c0_11 = arith.constant 0 : index
    %15 = vector.load %arg6[%c0_10, %c0_11] : memref<32x32xbf16, #tpu.memory_space<vmem>>, vector<32x32xbf16>
    %cst_12 = arith.constant dense<0.000000e+00> : vector<8x32xf32>
    %16 = tpu.matmul %14, %15, %cst_12 {dimension_numbers = #tpu.dot_dimension_numbers<[1], [0], [0], [1], [0, 0, 1, 1], [], []>} : vector<8x32xbf16>, vector<32x32xbf16>, vector<8x32xf32> -> vector<8x32xf32>
    %c0_13 = arith.constant 0 : index
    %c0_14 = arith.constant 0 : index
    %17 = vector.load %arg7[%c0_13, %c0_14] : memref<1x32xf32, #tpu.memory_space<vmem>>, vector<1x32xf32>
    %18 = vector.broadcast %17 : vector<1x32xf32> to vector<8x32xf32>
    %19 = arith.addf %16, %18 : vector<8x32xf32>
    %cst_15 = arith.constant 0.000000e+00 : f32
    %20 = vector.broadcast %cst_15 : f32 to vector<8x32xf32>
    %21 = arith.maximumf %19, %20 : vector<8x32xf32>
    %c0_16 = arith.constant 0 : index
    %c0_17 = arith.constant 0 : index
    %22 = vector.load %arg8[%c0_16, %c0_17] : memref<1x32xf32, #tpu.memory_space<vmem>>, vector<1x32xf32>
    %23 = vector.broadcast %22 : vector<1x32xf32> to vector<8x32xf32>
    %24 = arith.mulf %21, %23 : vector<8x32xf32>
    %cst_18 = arith.constant dense<0.000000e+00> : vector<8xf32>
    %25 = vector.multi_reduction <add>, %24, %cst_18 [1] : vector<8x32xf32> to vector<8xf32>
    %26 = vector.shape_cast %25 : vector<8xf32> to vector<8x1xf32>
    %c0_19 = arith.constant 0 : index
    %c0_20 = arith.constant 0 : index
    %27 = vector.load %arg9[%c0_19, %c0_20] : memref<1x1xf32, #tpu.memory_space<vmem>>, vector<1x1xf32>
    %28 = vector.broadcast %27 : vector<1x1xf32> to vector<8x1xf32>
    %29 = arith.addf %26, %28 : vector<8x1xf32>
    %c0_21 = arith.constant 0 : index
    %c0_22 = arith.constant 0 : index
    %30 = vector.load %arg10[%c0_21, %c0_22] : memref<8x1xf32, #tpu.memory_space<vmem>>, vector<8x1xf32>
    tpu.vector_store %arg10[%c0_21, %c0_22], %29 {strides = array<i32>} : memref<8x1xf32, #tpu.memory_space<vmem>>, vector<8x1xf32>,
    return
  }
  func.func @transform_0(%arg0: i32) -> (i32, i32) {
    %c0_i32 = arith.constant 0 : i32
    %c0_i32_0 = arith.constant 0 : i32
    return %arg0, %c0_i32 : i32, i32
  }
  func.func @transform_1(%arg0: i32) -> (i32, i32) {
    %c0_i32 = arith.constant 0 : i32
    %c0_i32_0 = arith.constant 0 : i32
    return %arg0, %c0_i32 : i32, i32
  }
  func.func @transform_2(%arg0: i32) -> (i32, i32) {
    %c0_i32 = arith.constant 0 : i32
    %c0_i32_0 = arith.constant 0 : i32
    %c0_i32_1 = arith.constant 0 : i32
    return %c0_i32, %c0_i32_0 : i32, i32
  }
  func.func @transform_3(%arg0: i32) -> (i32, i32) {
    %c0_i32 = arith.constant 0 : i32
    %c0_i32_0 = arith.constant 0 : i32
    %c0_i32_1 = arith.constant 0 : i32
    return %c0_i32, %c0_i32_0 : i32, i32
  }
  func.func @transform_4(%arg0: i32) -> (i32, i32) {
    %c0_i32 = arith.constant 0 : i32
    %c0_i32_0 = arith.constant 0 : i32
    %c0_i32_1 = arith.constant 0 : i32
    return %c0_i32, %c0_i32_0 : i32, i32
  }
  func.func @transform_5(%arg0: i32) -> (i32, i32) {
    %c0_i32 = arith.constant 0 : i32
    %c0_i32_0 = arith.constant 0 : i32
    %c0_i32_1 = arith.constant 0 : i32
    return %c0_i32, %c0_i32_0 : i32, i32
  }
  func.func @transform_6(%arg0: i32) -> (i32, i32) {
    %c0_i32 = arith.constant 0 : i32
    %c0_i32_0 = arith.constant 0 : i32
    %c0_i32_1 = arith.constant 0 : i32
    return %c0_i32, %c0_i32_0 : i32, i32
  }
  func.func @transform_7(%arg0: i32) -> (i32, i32) {
    %c0_i32 = arith.constant 0 : i32
    %c0_i32_0 = arith.constant 0 : i32
    %c0_i32_1 = arith.constant 0 : i32
    return %c0_i32, %c0_i32_0 : i32, i32
  }
  func.func @transform_8(%arg0: i32) -> (i32, i32) {
    %c0_i32 = arith.constant 0 : i32
    %c0_i32_0 = arith.constant 0 : i32
    %c0_i32_1 = arith.constant 0 : i32
    return %c0_i32, %c0_i32_0 : i32, i32
  }
  func.func @transform_9(%arg0: i32) -> (i32, i32) {
    %c0_i32 = arith.constant 0 : i32
    %c0_i32_0 = arith.constant 0 : i32
    return %arg0, %c0_i32 : i32, i32
  }
}

</mosaic_0001>

<llo_original>
// kernel: tpu_custom_call.1
$region0: #{tpu_custom_call.1}
  #allocation0 [shape = 'u32[]', space=smem, size = 0x4, offset = 0x4, fixed_abs, tag = 'smem constant byte address 0x4 - core index']
  #allocation1 [shape = 'u32[144,128]{1,0:T(1,128)}', space=vmem, size = 0x12000, scoped, tag = 'internal scratch']
  #allocation2 [shape = 'f32[1,1]{1,0:T(1,128)S(1)}', space=vmem, size = 0x200, scoped, tag = 'scoped memory for tpu_custom_call.1']
  %s0 = inlined_call_operand.vmem [shape: bf16[8,4], index: 0, kind: input, shape index: {}]
  %s1 = inlined_call_operand.vmem [shape: f32[8,1], index: 1, kind: input, shape index: {}]
  %s2 = inlined_call_operand.vmem [shape: bf16[4,32], index: 2, kind: input, shape index: {}]
  %s3 = inlined_call_operand.vmem [shape: f32[1,32], index: 3, kind: input, shape index: {}]
  %s4 = inlined_call_operand.vmem [shape: f32[1,32], index: 4, kind: input, shape index: {}]
  %s5 = inlined_call_operand.vmem [shape: bf16[32,32], index: 5, kind: input, shape index: {}]
  %s6 = inlined_call_operand.vmem [shape: f32[1,32], index: 6, kind: input, shape index: {}]
  %s7 = inlined_call_operand.vmem [shape: f32[1,32], index: 7, kind: input, shape index: {}]
  %s8 = inlined_call_operand.<no memory space> [shape: f32[1,1], index: 8, kind: input, shape index: {}]
  %s9 = inlined_call_operand.vmem [shape: f32[8,1], index: 9, kind: output, shape index: {}]
  %s10 = sld [smem:[#allocation0]]
  $region46: #{tpu_custom_call.1} parent=0
    _
  %s12 = ssub.s32 1, %s10
  %s13 = scalar_select 0, %s12, %s10
  %v14 = vstv %s8
  %15 = vst [vmem:[#allocation2] sm:$0x1] %v14
  // Predicated region
  $region2: #{tpu_custom_call.1} parent=0 // pred_check
    _
  $region3: #{tpu_custom_call.1} parent=0 // pred_check_branch
    %17 = sbr.rel (0) target = $region5
  $region4: #{tpu_custom_call.1} parent=0 // pred_region
    _
  $region5: #{tpu_custom_call.1} parent=0 // pred_fallthru
    _
  // Predicated region
  $region6: #{tpu_custom_call.1} parent=0 // pred_check
    _
  $region7: #{tpu_custom_call.1} parent=0 // pred_check_branch
    %19 = sbr.rel (0) target = $region9
  $region8: #{tpu_custom_call.1} parent=0 // pred_region
    _
  $region9: #{tpu_custom_call.1} parent=0 // pred_fallthru
    _
  // Predicated region
  $region10: #{tpu_custom_call.1} parent=0 // pred_check
    _
  $region11: #{tpu_custom_call.1} parent=0 // pred_check_branch
    %21 = sbr.rel (0) target = $region13
  $region12: #{tpu_custom_call.1} parent=0 // pred_region
    _
  $region13: #{tpu_custom_call.1} parent=0 // pred_fallthru
    _
  // Predicated region
  $region14: #{tpu_custom_call.1} parent=0 // pred_check
    _
  $region15: #{tpu_custom_call.1} parent=0 // pred_check_branch
    %23 = sbr.rel (0) target = $region17
  $region16: #{tpu_custom_call.1} parent=0 // pred_region
    _
  $region17: #{tpu_custom_call.1} parent=0 // pred_fallthru
    _
  // Predicated region
  $region18: #{tpu_custom_call.1} parent=0 // pred_check
    _
  $region19: #{tpu_custom_call.1} parent=0 // pred_check_branch
    %25 = sbr.rel (0) target = $region21
  $region20: #{tpu_custom_call.1} parent=0 // pred_region
    _
  $region21: #{tpu_custom_call.1} parent=0 // pred_fallthru
    _
  // Predicated region
  $region22: #{tpu_custom_call.1} parent=0 // pred_check
    _
  $region23: #{tpu_custom_call.1} parent=0 // pred_check_branch
    %27 = sbr.rel (0) target = $region25
  $region24: #{tpu_custom_call.1} parent=0 // pred_region
    _
  $region25: #{tpu_custom_call.1} parent=0 // pred_fallthru
    _
  // Predicated region
  $region26: #{tpu_custom_call.1} parent=0 // pred_check
    _
  $region27: #{tpu_custom_call.1} parent=0 // pred_check_branch
    %29 = sbr.rel (0) target = $region29
  $region28: #{tpu_custom_call.1} parent=0 // pred_region
    _
  $region29: #{tpu_custom_call.1} parent=0 // pred_fallthru
    _
  // Predicated region
  $region30: #{tpu_custom_call.1} parent=0 // pred_check
    _
  $region31: #{tpu_custom_call.1} parent=0 // pred_check_branch
    %31 = sbr.rel (0) target = $region33
  $region32: #{tpu_custom_call.1} parent=0 // pred_region
    _
  $region33: #{tpu_custom_call.1} parent=0 // pred_fallthru
    _
  // Predicated region
  $region34: #{tpu_custom_call.1} parent=0 // pred_check
    _
  $region35: #{tpu_custom_call.1} parent=0 // pred_check_branch
    %33 = sbr.rel (0) target = $region37
  $region36: #{tpu_custom_call.1} parent=0 // pred_region
    _
  $region37: #{tpu_custom_call.1} parent=0 // pred_fallthru
    _
  %v35 = vld [vmem:[%s0] sm:$0xf]
  %v36 = vld [vmem:[%s2] sm:$0x3]
  %v37 = vld [vmem:[%s1] sm:$0xff]
  %v38 = vld [vmem:[%s3] sm:$0x1]
  %40 = vset.pattern.permute.xlu0 0
  %41 = vperm.xlu0 %40, %v37
  %v42 = vpop.permute.xlu0 %41
  %v45 = vlaneseq
  %v46 = vshrl.u32 %v45, 7
  %v47 = vsub.s32 0, %v46
  %v48 = vrot.slane %v38, %v47
  %v50 = vmul.f32 %v42, %v48
  %vm51 = vcmask 31744
  %v53 = vsel %vm51, %v35, 0
  %vm55 = vcmask 1041408
  %v57 = vsel %vm55, %v36, 0
  %59 = vmatprep.subr.bf16.mxu0 0
  %60 = vmatpush1.bf16.msra.mxu0 %v57
  %61 = vmatprep.subr.bf16.mxu0 0
  %62 = vmatpush1.bf16.msra.mxu0 0
  %63 = vmatprep.subr.bf16.mxu0 0
  %64 = vmatpush1.bf16.msra.mxu0 0
  %65 = vmatprep.subr.bf16.mxu0 0
  %66 = vmatpush1.bf16.msra.mxu0 0
  %67 = vmatprep.subr.bf16.mxu0 0
  %68 = vmatpush1.bf16.msra.mxu0 0
  %69 = vmatprep.subr.bf16.mxu0 0
  %70 = vmatpush1.bf16.msra.mxu0 0
  %71 = vmatprep.subr.bf16.mxu0 0
  %72 = vmatpush1.bf16.msra.mxu0 0
  %73 = vmatprep.subr.bf16.mxu0 0
  %74 = vmatpush1.bf16.msra.mxu0 0
  %75 = vmatprep.subr.bf16.mxu0 0
  %76 = vmatpush1.bf16.msra.mxu0 0
  %77 = vmatprep.subr.bf16.mxu0 0
  %78 = vmatpush1.bf16.msra.mxu0 0
  %79 = vmatprep.subr.bf16.mxu0 0
  %80 = vmatpush1.bf16.msra.mxu0 0
  %81 = vmatprep.subr.bf16.mxu0 0
  %82 = vmatpush1.bf16.msra.mxu0 0
  %83 = vmatprep.subr.bf16.mxu0 0
  %84 = vmatpush1.bf16.msra.mxu0 0
  %85 = vmatprep.subr.bf16.mxu0 0
  %86 = vmatpush1.bf16.msra.mxu0 0
  %87 = vmatprep.subr.bf16.mxu0 0
  %88 = vmatpush1.bf16.msra.mxu0 0
  %89 = vmatprep.subr.bf16.mxu0 0
  %90 = vmatpush1.bf16.msra.mxu0 0
  %91 = vmatprep.mubr.bf16.mxu0 0
  %92 = vmatmul.mubr.bf16.gmra.mrb[0].mxu0 %v53
  %v93 = vpop.f32.mrb[0].mxu0
  %v94 = vadd.f32 %v50, %v93
  %v95 = vpop.f32.mrb[0].mxu0
  %v96 = vpop.f32.mrb[0].mxu0
  %v97 = vpop.f32.mrb[0].mxu0
  %98 = vdwg.mxu0
  %v99 = vld [vmem:[%s4] sm:$0x1]
  %v101 = vlaneseq
  %v102 = vshrl.u32 %v101, 7
  %v103 = vsub.s32 0, %v102
  %v104 = vrot.slane %v99, %v103
  %v106 = vadd.f32 %v94, %v104
  %v107 = vmax.f32 %v106, 0.0
  %v108 = vpack.c.bf16 %v107, %v107
  %v109 = vld [vmem:[%s5] sm:$0xf]
  %v110 = vld [vmem:[%s5 + $0x4] sm:$0xf]
  %v111 = vld [vmem:[%s5 + $0x8] sm:$0xf]
  %v112 = vld [vmem:[%s5 + $0xc] sm:$0xf]
  %v113 = vld [vmem:[%s6] sm:$0x1]
  %v115 = vlaneseq
  %v116 = vshrl.u32 %v115, 7
  %v117 = vsub.s32 0, %v116
  %v118 = vrot.slane %v113, %v117
  %v124 = vunpack.c.l.b16 %v109
  %v125 = vunpack.c.l.b16 %v110
  %v126 = vunpack.c.l.b16 %v111
  %v127 = vunpack.c.l.b16 %v112
  %v128 = vpack.c.b16 %v125, %v124
  %v129 = vpack.c.b16 %v127, %v126
  %vm132 = vcmask 261120
  %v134 = vsel %vm132, %v108, 0
  %136 = vmatprep.subr.bf16.mxu0 0
  %137 = vmatpush1.bf16.msra.mxu0 %v128
  %138 = vmatprep.subr.bf16.mxu0 0
  %139 = vmatpush1.bf16.msra.mxu0 %v129
  %140 = vmatprep.subr.bf16.mxu0 0
  %141 = vmatpush1.bf16.msra.mxu0 0
  %142 = vmatprep.subr.bf16.mxu0 0
  %143 = vmatpush1.bf16.msra.mxu0 0
  %144 = vmatprep.subr.bf16.mxu0 0
  %145 = vmatpush1.bf16.msra.mxu0 0
  %146 = vmatprep.subr.bf16.mxu0 0
  %147 = vmatpush1.bf16.msra.mxu0 0
  %148 = vmatprep.subr.bf16.mxu0 0
  %149 = vmatpush1.bf16.msra.mxu0 0
  %150 = vmatprep.subr.bf16.mxu0 0
  %151 = vmatpush1.bf16.msra.mxu0 0
  %152 = vmatprep.subr.bf16.mxu0 0
  %153 = vmatpush1.bf16.msra.mxu0 0
  %154 = vmatprep.subr.bf16.mxu0 0
  %155 = vmatpush1.bf16.msra.mxu0 0
  %156 = vmatprep.subr.bf16.mxu0 0
  %157 = vmatpush1.bf16.msra.mxu0 0
  %158 = vmatprep.subr.bf16.mxu0 0
  %159 = vmatpush1.bf16.msra.mxu0 0
  %160 = vmatprep.subr.bf16.mxu0 0
  %161 = vmatpush1.bf16.msra.mxu0 0
  %162 = vmatprep.subr.bf16.mxu0 0
  %163 = vmatpush1.bf16.msra.mxu0 0
  %164 = vmatprep.subr.bf16.mxu0 0
  %165 = vmatpush1.bf16.msra.mxu0 0
  %166 = vmatprep.subr.bf16.mxu0 0
  %167 = vmatpush1.bf16.msra.mxu0 0
  %168 = vmatprep.mubr.bf16.mxu0 0
  %169 = vmatmul.mubr.bf16.gmra.mrb[0].mxu0 %v134
  %v170 = vpop.f32.mrb[0].mxu0
  %v171 = vadd.f32 %v118, %v170
  %v172 = vpop.f32.mrb[0].mxu0
  %v173 = vpop.f32.mrb[0].mxu0
  %v174 = vpop.f32.mrb[0].mxu0
  %175 = vdwg.mxu0
  %v176 = vmax.f32 %v171, 0.0
  %v177 = vld [vmem:[%s7] sm:$0x1]
  %v179 = vlaneseq
  %v180 = vshrl.u32 %v179, 7
  %v181 = vsub.s32 0, %v180
  %v182 = vrot.slane %v177, %v181
  %v184 = vmul.f32 %v176, %v182
  %v185 = vsel %vm132, %v184, 0.0
  %186 = vadd.xlane.f32.xlu0 %v185
  %v187 = vpop.xlane.xlu0 %186
  %v188 = vld [vmem:[#allocation2] sm:$0x1]
  %v190 = vlaneseq
  %v191 = vshrl.u32 %v190, 7
  %v192 = vsub.s32 0, %v191
  %v193 = vrot.slane %v188, %v192
  %v195 = vadd.f32 %v187, %v193
  %vm196 = vcmask 7168
  %197 = vst.msk [vmem:[%s9] sm:$0xff] %vm196, %v195
  // Predicated region
  $region38: #{tpu_custom_call.1} parent=0 // pred_check
    _
  $region39: #{tpu_custom_call.1} parent=0 // pred_check_branch
    %199 = sbr.rel (0) target = $region41
  $region40: #{tpu_custom_call.1} parent=0 // pred_region
    _
  $region41: #{tpu_custom_call.1} parent=0 // pred_fallthru
    _
  // Predicated region
  $region42: #{tpu_custom_call.1} parent=0 // pred_check
    _
  $region43: #{tpu_custom_call.1} parent=0 // pred_check_branch
    %201 = sbr.rel (0) target = $region45
  $region44: #{tpu_custom_call.1} parent=0 // pred_region
    _
  $region45: #{tpu_custom_call.1} parent=0 // pred_fallthru
    _

</llo_original>
